<compile_context>
chip_gen: v7x
topology: tpu7x:2x2x1
jax: 0.10.0
libtpu: 0.0.40
codegen_flags: <defaults>
</compile_context>

<pallas_src>
import numpy as np
import jax
import jax.numpy as jnp
from jax.experimental import pallas as pl
from jax.experimental.pallas import tpu as pltpu

_INT32_MAX = int(np.iinfo(np.int32).max)


def _round_up(x: int, m: int) -> int:
    return ((x + m - 1) // m) * m


# ----------------------------------------------------------------------------
# Pallas kernel: nearest-neighbour tokenization
#   grid = (M tiles [parallel], V tiles [arbitrary reduction])
#   pt_ref : (D+1, TM) f32   transposed, augmented patches ([p ; 1])
#   vb_ref : (TV, D+1) f32   augmented vocab tile ([-2*v | ||v||^2])
#   tok_ref: (1, TM) i32     lane-dense token row (written at last V tile)
#   min_sc / arg_sc: running (min, argmin) over V tiles
# ----------------------------------------------------------------------------
def _nn_tokenize_kernel(pt_ref, vb_ref, tok_ref, min_sc, arg_sc):
    k = pl.program_id(1)
    TV = vb_ref.shape[0]

    @pl.when(k == 0)
    def _():
        min_sc[...] = jnp.full_like(min_sc, jnp.inf)
        arg_sc[...] = jnp.zeros_like(arg_sc)

    # score[v, m] = ||v||^2 - 2 <v, p_m>  (argmin-invariant ||p_m||^2 dropped);
    # both terms come out of a single MXU matmul thanks to the augmentation.
    score = jnp.dot(vb_ref[...], pt_ref[...],
                    preferred_element_type=jnp.float32)            # (TV, TM)

    # first-occurrence argmin within this vocab tile; iota is (TV, 1) and the
    # select broadcasts it along lanes (no full (TV, TM) iota fill).
    tile_min = jnp.min(score, axis=0, keepdims=True)               # (1, TM)
    idx = jax.lax.broadcasted_iota(jnp.int32, (TV, 1), 0) + k * TV  # (TV, 1)
    hit = jnp.where(score <= tile_min, idx, jnp.int32(_INT32_MAX))  # (TV, TM)
    tile_arg = jnp.min(hit, axis=0, keepdims=True)                 # (1, TM)

    # combine with running result; strict '<' keeps earlier (lower-index) ties.
    better = tile_min < min_sc[...]
    arg_sc[...] = jnp.where(better, tile_arg, arg_sc[...])
    min_sc[...] = jnp.where(better, tile_min, min_sc[...])

    @pl.when(k == pl.num_programs(1) - 1)
    def _():
        tok_ref[...] = arg_sc[...]


def nn_tokenize(patches: jnp.ndarray, vocab: jnp.ndarray, *,
                tile_m: int | None = None,
                tile_v: int | None = None) -> jnp.ndarray:
    """patches: (B, N, D) f32, vocab: (V, D) f32 -> tokens (B, N) int32."""
    B, N, D = patches.shape
    V, Dv = vocab.shape
    assert D == Dv
    M = B * N
    Daug = D + 1

    # Per-generation VMEM budget (v5e/v6e 128 MiB, v7x 64 MiB).
    try:
        cap = int(pltpu.get_tpu_info().vmem_capacity_bytes)
    except Exception:
        cap = 64 << 20
    budget = max(24 << 20, int(cap * 0.45))

    if tile_m is None:
        tile_m = 2048 if cap >= (96 << 20) else 1024   # bigger tiles on 128 MiB parts
    TM = max(128, _round_up(int(tile_m), 128))
    if tile_v is None:
        tile_v = 512
    TV = min(max(8, _round_up(int(tile_v), 8)), _round_up(V, 8))

    def est(tm, tv):
        # lane/sublane-padded VMEM footprint: double-buffered pt + vocab blocks,
        # out + scratch rows, plus (TV,TM) score / select / hit temporaries.
        sub_d = _round_up(Daug, 8)
        lane_d = _round_up(Daug, 128)
        return ((2 * sub_d * tm) + (2 * tv * lane_d)
                + (4 * 8 * tm) + (3 * tv * tm)) * 4 + (2 << 20)

    while est(TM, TV) > budget:
        if TM > 128:
            TM = max(128, _round_up(TM // 2, 128))
        elif TV > 8:
            TV = max(8, _round_up(TV // 2, 8))
        else:
            break

    # Lane-dense M tiling (TM multiple of 128); ensure >= 2 grid steps when M
    # allows so both TensorCores are used on megacore parts.
    M128 = _round_up(max(M, 1), 128)
    TM = min(TM, M128)
    n128 = M128 // 128
    if n128 >= 2 and M128 // TM < 2:
        TM = ((n128 + 1) // 2) * 128
    M_pad = _round_up(M, TM)
    num_tiles = M_pad // TM

    V_pad = _round_up(V, TV)
    num_vtiles = V_pad // TV

    # Augmented vocab: [-2*v | ||v||^2]; padded rows get a huge bias so they
    # never win the argmin.
    vocab_f = vocab.astype(jnp.float32)
    v2 = jnp.sum(vocab_f * vocab_f, axis=-1, keepdims=True)        # (V, 1)
    vb_aug = jnp.concatenate([-2.0 * vocab_f, v2], axis=1)         # (V, D+1)
    if V_pad != V:
        pad = jnp.concatenate(
            [jnp.zeros((V_pad - V, D), jnp.float32),
             jnp.full((V_pad - V, 1), 1e30, jnp.float32)], axis=1)
        vb_aug = jnp.concatenate([vb_aug, pad], axis=0)

    # Augmented, transposed patch slab (D+1, M_pad): [p ; 1].  Under jit the
    # transpose/concat/pad fuses with the preceding patchify gather; padded
    # columns are all-zero and their (arbitrary) tokens are sliced off below.
    pt = patches.reshape(M, D).astype(jnp.float32).T               # (D, M)
    pt_aug = jnp.concatenate([pt, jnp.ones((1, M), jnp.float32)], axis=0)
    if M_pad != M:
        pt_aug = jnp.pad(pt_aug, ((0, 0), (0, M_pad - M)))

    vmem_bytes = int(min(max(est(TM, TV), 4 << 20), int(cap * 0.85)))

    tokens = pl.pallas_call(
        _nn_tokenize_kernel,
        out_shape=jax.ShapeDtypeStruct((1, M_pad), jnp.int32),
        grid=(num_tiles, num_vtiles),
        in_specs=[
            pl.BlockSpec((Daug, TM), lambda i, k: (0, i)),   # patches^T, M-tiled
            pl.BlockSpec((TV, Daug), lambda i, k: (k, 0)),   # vocab, V-tiled
        ],
        out_specs=pl.BlockSpec((1, TM), lambda i, k: (0, i)),  # lane-dense tokens
        scratch_shapes=[
            pltpu.VMEM((1, TM), jnp.float32),   # running min
            pltpu.VMEM((1, TM), jnp.int32),     # running argmin
        ],
        compiler_params=pltpu.CompilerParams(
            dimension_semantics=("parallel", "arbitrary"),
            vmem_limit_bytes=vmem_bytes,
        ),
    )(pt_aug, vb_aug)

    return tokens[0, :M].reshape(B, N)


# ----------------------------------------------------------------------------
# BoldTokenizer (JAX port).  Parameters initialized deterministically in-script.
# ----------------------------------------------------------------------------
class BoldTokenizer:
    def __init__(self, mask, patch_size: int, vocab_size: int,
                 ordering: str = "raster", key=None):
        mask = np.asarray(mask, dtype=bool)
        H, W = mask.shape
        assert H % patch_size == 0 and W % patch_size == 0
        self.patch_size = patch_size
        self.vocab_size = vocab_size
        self.ordering = ordering
        self._mask_np = mask
        self.mask = jnp.asarray(mask)

        gh, gw = H // patch_size, W // patch_size
        patch_mask = mask.reshape(gh, patch_size, gw, patch_size)
        patch_mask = patch_mask.transpose(0, 2, 1, 3).reshape(
            gh * gw, patch_size * patch_size)
        keep = patch_mask.any(axis=1)
        self.keep_idx = np.nonzero(keep)[0]
        self.patch_mask = patch_mask[keep]
        self.num_patches = int(keep.sum())
        self.dim = patch_size * patch_size

        if ordering == "raster":
            default_order = np.arange(self.num_patches)
        elif ordering == "radial":
            default_order = self._radial_order()
        elif ordering == "random":
            default_order = np.random.RandomState(0).permutation(self.num_patches)
        else:
            raise ValueError(f"Unknown ordering {ordering}")
        self.default_order = jnp.asarray(default_order, dtype=jnp.int32)
        self.default_ranking = jnp.asarray(np.argsort(default_order),
                                           dtype=jnp.int32)
        # fused gather index: keep_idx ∘ default_order (single gather at forward)
        self._ordered_keep_idx = jnp.asarray(
            self.keep_idx[np.asarray(default_order)], dtype=jnp.int32)
        self._keep_idx_j = jnp.asarray(self.keep_idx, dtype=jnp.int32)

        if key is None:
            key = jax.random.PRNGKey(0)
        # deterministic stand-in for torch.randn(vocab_size, dim)
        self.vocab = jax.random.normal(key, (vocab_size, self.dim),
                                       dtype=jnp.float32)

    # TODO(synk): fit() (sklearn MiniBatchKMeans training) is not a forward op; omitted.

    # ---- patchify glue (plain JAX) ----
    def _patchify_all(self, images: jnp.ndarray) -> jnp.ndarray:
        B, H, W = images.shape
        P = self.patch_size
        gh, gw = H // P, W // P
        x = images * self.mask.astype(images.dtype)[None]
        x = x.reshape(B, gh, P, gw, P).transpose(0, 1, 3, 2, 4)
        return x.reshape(B, gh * gw, P * P)

    def patchify(self, images: jnp.ndarray) -> jnp.ndarray:
        return self._patchify_all(images)[:, self._keep_idx_j]

    def forward_patches(self, images: jnp.ndarray) -> jnp.ndarray:
        # single fused gather == patchify(...)[:, default_order, :]
        return self._patchify_all(images)[:, self._ordered_keep_idx]

    def forward_tokens(self, patches: jnp.ndarray) -> jnp.ndarray:
        return nn_tokenize(patches, self.vocab)

    def __call__(self, images: jnp.ndarray):
        patches = self.forward_patches(images)
        tokens = self.forward_tokens(patches)
        return patches, tokens

    # ---- inverse path (glue) ----
    def lookup(self, tokens: jnp.ndarray) -> jnp.ndarray:
        return self.vocab[tokens]

    def inverse_patches(self, patches: jnp.ndarray) -> jnp.ndarray:
        patches = patches[:, self.default_ranking]
        B = patches.shape[0]
        P = self.patch_size
        H, W = self._mask_np.shape
        gh, gw = H // P, W // P
        full = jnp.zeros((B, gh * gw, P * P), patches.dtype)
        full = full.at[:, self._keep_idx_j].set(patches)
        imgs = full.reshape(B, gh, gw, P, P).transpose(0, 1, 3, 2, 4)
        imgs = imgs.reshape(B, H, W)
        return imgs * self.mask.astype(patches.dtype)[None]

    def inverse(self, tokens: jnp.ndarray) -> jnp.ndarray:
        return self.inverse_patches(self.lookup(tokens))

    def _radial_order(self):
        mask = self._mask_np
        H, W = mask.shape
        yy, xx = np.meshgrid(np.arange(H, dtype=np.float32),
                             np.arange(W, dtype=np.float32), indexing="ij")
        coord = np.stack([yy, xx], axis=-1)
        centroid = coord[mask].mean(axis=0)
        dist = np.linalg.norm(coord - centroid, axis=-1)
        P = self.patch_size
        gh, gw = H // P, W // P
        d = (dist * mask).reshape(gh, P, gw, P).transpose(0, 2, 1, 3)
        d = d.reshape(gh * gw, P * P)[self.keep_idx]
        return np.argsort(np.median(d, axis=1))


# ----------------------------------------------------------------------------
if __name__ == "__main__":
    H = W = 16
    patch_size = 4
    vocab_size = 32
    B = 2

    # deterministic circular brain-like mask -> some patches are excluded
    yy, xx = np.meshgrid(np.arange(H), np.arange(W), indexing="ij")
    mask_np = ((yy - 8) ** 2 + (xx - 8) ** 2) <= 36

    key = jax.random.PRNGKey(0)
    k_vocab, k_img = jax.random.split(key)

    tok = BoldTokenizer(mask_np, patch_size=patch_size,
                        vocab_size=vocab_size, ordering="raster", key=k_vocab)

    images = jax.random.normal(k_img, (B, H, W), dtype=jnp.float32)

    fwd = jax.jit(lambda im: tok(im))
    patches, tokens = jax.block_until_ready(fwd(images))

    assert patches.shape == (B, tok.num_patches, tok.dim)
    assert tokens.shape == (B, tok.num_patches)
    assert tokens.dtype == jnp.int32

    # pure-JAX nearest-neighbour reference (cdist + argmin).  The kernel drops
    # the argmin-invariant ||p||^2 term, so use a tie/rounding tolerant check:
    # the kernel's chosen code must achieve (within tolerance) the min distance.
    ref_d2 = jnp.sum((patches[..., None, :] - tok.vocab[None, None]) ** 2, axis=-1)
    ref_min = jnp.min(ref_d2, axis=-1)
    kern_d2 = jnp.take_along_axis(ref_d2, tokens[..., None], axis=-1)[..., 0]
    assert bool(jnp.all(kern_d2 <= ref_min + 1e-3 * (1.0 + ref_min)))

    print("KERNEL_OK")
</pallas_src>

<mosaic_0001>
module attributes {stable_mosaic.version = 11 : i64} {
  func.func @_nn_tokenize_kernel(%arg0: i32, %arg1: i32, %arg2: memref<17x128xf32, #tpu.memory_space<vmem>>, %arg3: memref<32x17xf32, #tpu.memory_space<vmem>>, %arg4: memref<1x128xi32, #tpu.memory_space<vmem>>, %arg5: memref<1x128xf32, #tpu.memory_space<vmem>>, %arg6: memref<1x128xi32, #tpu.memory_space<vmem>>) attributes {dimension_semantics = [#tpu.dimension_semantics<parallel>, #tpu.dimension_semantics<arbitrary>], iteration_bounds = array<i64: 1, 1>, scalar_prefetch = 0 : i64, scratch_operands = 2 : i64, tpu.core_type = #tpu.core_type<tc>, window_params = [{transform_indices = @transform_0, window_bounds = array<i64: 17, 128>}, {transform_indices = @transform_1, window_bounds = array<i64: 32, 17>}, {transform_indices = @transform_2, window_bounds = array<i64: 1, 128>}]} {
    %c0_i32 = arith.constant 0 : i32
    %0 = arith.cmpi eq, %arg1, %c0_i32 : i32
    %1 = arith.extui %0 : i1 to i32
    %c0_i32_0 = arith.constant 0 : i32
    %2 = arith.cmpi ne, %1, %c0_i32_0 : i32
    scf.if %2 {
      %cst_18 = arith.constant 0x7F800000 : f32
      %31 = vector.broadcast %cst_18 : f32 to vector<1x128xf32>
      %c0_19 = arith.constant 0 : index
      %c0_20 = arith.constant 0 : index
      %32 = vector.load %arg5[%c0_19, %c0_20] : memref<1x128xf32, #tpu.memory_space<vmem>>, vector<1x128xf32>
      tpu.vector_store %arg5[%c0_19, %c0_20], %31 {strides = array<i32>} : memref<1x128xf32, #tpu.memory_space<vmem>>, vector<1x128xf32>,
      %c0_i32_21 = arith.constant 0 : i32
      %33 = vector.broadcast %c0_i32_21 : i32 to vector<1x128xi32>
      %c0_22 = arith.constant 0 : index
      %c0_23 = arith.constant 0 : index
      %34 = vector.load %arg6[%c0_22, %c0_23] : memref<1x128xi32, #tpu.memory_space<vmem>>, vector<1x128xi32>
      tpu.vector_store %arg6[%c0_22, %c0_23], %33 {strides = array<i32>} : memref<1x128xi32, #tpu.memory_space<vmem>>, vector<1x128xi32>,
    } else {
    }
    %c0 = arith.constant 0 : index
    %c0_1 = arith.constant 0 : index
    %3 = vector.load %arg3[%c0, %c0_1] : memref<32x17xf32, #tpu.memory_space<vmem>>, vector<32x17xf32>
    %c0_2 = arith.constant 0 : index
    %c0_3 = arith.constant 0 : index
    %4 = vector.load %arg2[%c0_2, %c0_3] : memref<17x128xf32, #tpu.memory_space<vmem>>, vector<17x128xf32>
    %cst = arith.constant dense<0.000000e+00> : vector<32x128xf32>
    %5 = tpu.matmul %3, %4, %cst {dimension_numbers = #tpu.dot_dimension_numbers<[1], [0], [0], [1], [0, 0, 1, 1], [], []>} : vector<32x17xf32>, vector<17x128xf32>, vector<32x128xf32> -> vector<32x128xf32>
    %cst_4 = arith.constant dense<0x7F800000> : vector<128xf32>
    %6 = vector.multi_reduction <minimumf>, %5, %cst_4 [0] : vector<32x128xf32> to vector<128xf32>
    %7 = vector.shape_cast %6 : vector<128xf32> to vector<1x128xf32>
    %8 = tpu.iota {dimensions = array<i32: 0>} : vector<32x1xi32>
    %c32_i32 = arith.constant 32 : i32
    %9 = arith.muli %arg1, %c32_i32 : i32
    %10 = vector.broadcast %9 : i32 to vector<32x1xi32>
    %11 = arith.addi %8, %10 : vector<32x1xi32>
    %12 = vector.broadcast %7 : vector<1x128xf32> to vector<32x128xf32>
    %13 = arith.cmpf ole, %5, %12 : vector<32x128xf32>
    %c2147483647_i32 = arith.constant 2147483647 : i32
    %14 = vector.shape_cast %11 : vector<32x1xi32> to vector<32x1xi32>
    %15 = vector.broadcast %14 : vector<32x1xi32> to vector<32x128xi32>
    %16 = vector.broadcast %c2147483647_i32 : i32 to vector<32x128xi32>
    %17 = arith.select %13, %15, %16 : vector<32x128xi1>, vector<32x128xi32>
    %cst_5 = arith.constant dense<2147483647> : vector<128xi32>
    %18 = vector.multi_reduction <minsi>, %17, %cst_5 [0] : vector<32x128xi32> to vector<128xi32>
    %19 = vector.shape_cast %18 : vector<128xi32> to vector<1x128xi32>
    %c0_6 = arith.constant 0 : index
    %c0_7 = arith.constant 0 : index
    %20 = vector.load %arg5[%c0_6, %c0_7] : memref<1x128xf32, #tpu.memory_space<vmem>>, vector<1x128xf32>
    %21 = arith.cmpf olt, %7, %20 : vector<1x128xf32>
    %c0_8 = arith.constant 0 : index
    %c0_9 = arith.constant 0 : index
    %22 = vector.load %arg6[%c0_8, %c0_9] : memref<1x128xi32, #tpu.memory_space<vmem>>, vector<1x128xi32>
    %23 = arith.select %21, %19, %22 : vector<1x128xi1>, vector<1x128xi32>
    %c0_10 = arith.constant 0 : index
    %c0_11 = arith.constant 0 : index
    %24 = vector.load %arg6[%c0_10, %c0_11] : memref<1x128xi32, #tpu.memory_space<vmem>>, vector<1x128xi32>
    tpu.vector_store %arg6[%c0_10, %c0_11], %23 {strides = array<i32>} : memref<1x128xi32, #tpu.memory_space<vmem>>, vector<1x128xi32>,
    %c0_12 = arith.constant 0 : index
    %c0_13 = arith.constant 0 : index
    %25 = vector.load %arg5[%c0_12, %c0_13] : memref<1x128xf32, #tpu.memory_space<vmem>>, vector<1x128xf32>
    %26 = arith.select %21, %7, %25 : vector<1x128xi1>, vector<1x128xf32>
    %c0_14 = arith.constant 0 : index
    %c0_15 = arith.constant 0 : index
    %27 = vector.load %arg5[%c0_14, %c0_15] : memref<1x128xf32, #tpu.memory_space<vmem>>, vector<1x128xf32>
    tpu.vector_store %arg5[%c0_14, %c0_15], %26 {strides = array<i32>} : memref<1x128xf32, #tpu.memory_space<vmem>>, vector<1x128xf32>,
    %c0_i32_16 = arith.constant 0 : i32
    %28 = arith.cmpi eq, %arg1, %c0_i32_16 : i32
    %29 = arith.extui %28 : i1 to i32
    %c0_i32_17 = arith.constant 0 : i32
    %30 = arith.cmpi ne, %29, %c0_i32_17 : i32
    scf.if %30 {
      %c0_18 = arith.constant 0 : index
      %c0_19 = arith.constant 0 : index
      %31 = vector.load %arg6[%c0_18, %c0_19] : memref<1x128xi32, #tpu.memory_space<vmem>>, vector<1x128xi32>
      %c0_20 = arith.constant 0 : index
      %c0_21 = arith.constant 0 : index
      %32 = vector.load %arg4[%c0_20, %c0_21] : memref<1x128xi32, #tpu.memory_space<vmem>>, vector<1x128xi32>
      tpu.vector_store %arg4[%c0_20, %c0_21], %31 {strides = array<i32>} : memref<1x128xi32, #tpu.memory_space<vmem>>, vector<1x128xi32>,
    } else {
    }
    return
  }
  func.func @transform_0(%arg0: i32, %arg1: i32) -> (i32, i32) {
    %c0_i32 = arith.constant 0 : i32
    %c0_i32_0 = arith.constant 0 : i32
    return %c0_i32, %arg0 : i32, i32
  }
  func.func @transform_1(%arg0: i32, %arg1: i32) -> (i32, i32) {
    %c0_i32 = arith.constant 0 : i32
    %c0_i32_0 = arith.constant 0 : i32
    return %arg1, %c0_i32 : i32, i32
  }
  func.func @transform_2(%arg0: i32, %arg1: i32) -> (i32, i32) {
    %c0_i32 = arith.constant 0 : i32
    %c0_i32_0 = arith.constant 0 : i32
    return %c0_i32, %arg0 : i32, i32
  }
}

</mosaic_0001>

<llo_original>
// kernel: squeeze.1
$region0: #{squeeze.1}
  %s0 = inlined_call_operand.vmem [shape: s32[26], index: 0, kind: input, shape index: {}]
  %s1 = inlined_call_operand.hbm [shape: s32[2,13], index: 1, kind: output, shape index: {}]
  $region1: #{squeeze.1} parent=0
    #allocation0 [shape = 'u8[1024]{0}', space=vmem, size = 0x400, scoped, tag = 'operand span for operand 1']
    #allocation1 [shape = 's32[1]{0}', space=sflag, size = 0x4, scoped, tag = 'scoped memory for squeeze.1']
    #allocation2 [shape = 'u8[4096]{0}', space=vmem, size = 0x1000, scoped, tag = 'scoped mem for output reshape']
    #allocation3 [shape = 'u8[4096]{0}', space=vmem, size = 0x1000, scoped, tag = 'scoped mem for input reshape']
    %2 = vsyncpa [#allocation1], 0
    %s4 = sshllo.u32 0, 1
    %v5 = vld [vmem:[%s0] sm:%s4]
    %6 = vst [vmem:[#allocation3] sm:%s4] %v5
    %v7 = vld [vmem:[#allocation3] sm:$0x1]
    %vm8 = vcmask 105472
    %9 = vst.msk [vmem:[#allocation2] sm:$0x1] %vm8, %v7
    %v10 = vld [vmem:[#allocation3] sm:$0x1]
    %11 = vrot.lane.b32.xlu0 %v10, 115
    %v12 = vpop.permute.xlu0 %11
    %vm13 = vcmask 105472
    %s14 = scalar_lea.vmem [#allocation2], 1
    %15 = vst.msk [vmem:[%s14] sm:$0x1] %vm13, %v12
    %s17 = sshllo.u32 0, 2
    %v19 = vld [vmem:[#allocation2] sm:%s17]
    %s20 = sshllo.u32 0, 2
    %21 = vst [vmem:[#allocation0] sm:%s20] %v19
    %s23 = ssub.s32 32, 32
    %24 = vsyncadd [#allocation1], %s23
    %s26 = sshll.u32 [#allocation0], 4
    %s27 = int_to_ptr.vmem [resolvable:$true] %s26
    %29 = dma.vmem_to_hbm [thread:$0]  %s27, 32, %s1, [#allocation1]
    %30 = dma.done [#allocation1], 32
    %31 = vsyncpa [#allocation1], 1

// kernel: _lambda_.1
$region0: #{_lambda_.1}
  #allocation0 [shape = 'u32[]', space=smem, size = 0x4, offset = 0x4, fixed_abs, tag = 'smem constant byte address 0x4 - core index']
  #allocation1 [shape = 'u32[144,128]{1,0:T(1,128)}', space=vmem, size = 0x12000, scoped, tag = 'internal scratch']
  #allocation2 [shape = 'f32[1,128]{1,0:T(1,128)}', space=vmem, size = 0x200, scoped, tag = 'scratch operand']
  #allocation3 [shape = 's32[1,128]{1,0:T(1,128)}', space=vmem, size = 0x200, scoped, tag = 'scratch operand']
  %s0 = inlined_call_operand.vmem [shape: f32[17,128], index: 0, kind: input, shape index: {}]
  %s1 = inlined_call_operand.vmem [shape: f32[32,17], index: 1, kind: input, shape index: {}]
  %s2 = inlined_call_operand.vmem [shape: s32[1,128], index: 2, kind: output, shape index: {}]
  %s3 = sld [smem:[#allocation0]]
  $region26: #{_lambda_.1} parent=0
    _
  %s5 = ssub.s32 1, %s3
  %s6 = scalar_select 0, %s5, %s3
  // Predicated region
  $region2: #{_lambda_.1} parent=0 // pred_check
    _
  $region3: #{_lambda_.1} parent=0 // pred_check_branch
    %8 = sbr.rel (0) target = $region5
  $region4: #{_lambda_.1} parent=0 // pred_region
    _
  $region5: #{_lambda_.1} parent=0 // pred_fallthru
    _
  // Predicated region
  $region6: #{_lambda_.1} parent=0 // pred_check
    _
  $region7: #{_lambda_.1} parent=0 // pred_check_branch
    %10 = sbr.rel (0) target = $region9
  $region8: #{_lambda_.1} parent=0 // pred_region
    _
  $region9: #{_lambda_.1} parent=0 // pred_fallthru
    _
  %p11 = scmp.eq.s32.totalorder 0, 0
  // Predicated region
  $region10: #{_lambda_.1} parent=0 // pred_check
    %p12 = pneg %p11
  $region11: #{_lambda_.1} parent=0 // pred_check_branch
    %14 = sbr.rel (%p12) target = $region13
  $region12: #{_lambda_.1} parent=0 // pred_region
    %15 = vst [vmem:[#allocation2] sm:$0x1] inf
    %16 = vst [vmem:[#allocation3] sm:$0x1] 0
  $region13: #{_lambda_.1} parent=0 // pred_fallthru
    _
  %v17 = vld [vmem:[%s1] sm:$0xff]
  %v18 = vld [vmem:[%s1 + $0x8] sm:$0xff]
  %v19 = vld [vmem:[%s1 + $0x10] sm:$0xff]
  %v20 = vld [vmem:[%s1 + $0x18] sm:$0xff]
  %v21 = vld [vmem:[%s0] sm:$0xff]
  %v22 = vld [vmem:[%s0 + $0x8] sm:$0xff]
  %v23 = vld [vmem:[%s0 + $0x10] sm:$0x1]
  %vm24 = vcmask 138240
  %v26 = vsel %vm24, %v17, 0
  %v29 = vsel %vm24, %v18, 0
  %v32 = vsel %vm24, %v19, 0
  %v35 = vsel %vm24, %v20, 0
  %vm37 = vcmask 1040384
  %v39 = vsel %vm37, %v23, 0
  %41 = vmatprep.subr.mxu0 0.0
  %42 = vmatpush1.msra.mxu0 %v21
  %43 = vmatprep.subr.mxu0 0.0
  %44 = vmatpush1.msra.mxu0 %v22
  %45 = vmatprep.subr.mxu0 0.0
  %46 = vmatpush1.msra.mxu0 %v39
  %47 = vmatprep.subr.mxu0 0.0
  %48 = vmatpush1.msra.mxu0 0.0
  %49 = vmatprep.subr.mxu0 0.0
  %50 = vmatpush1.msra.mxu0 0.0
  %51 = vmatprep.subr.mxu0 0.0
  %52 = vmatpush1.msra.mxu0 0.0
  %53 = vmatprep.subr.mxu0 0.0
  %54 = vmatpush1.msra.mxu0 0.0
  %55 = vmatprep.subr.mxu0 0.0
  %56 = vmatpush1.msra.mxu0 0.0
  %57 = vmatprep.subr.mxu0 0.0
  %58 = vmatpush1.msra.mxu0 0.0
  %59 = vmatprep.subr.mxu0 0.0
  %60 = vmatpush1.msra.mxu0 0.0
  %61 = vmatprep.subr.mxu0 0.0
  %62 = vmatpush1.msra.mxu0 0.0
  %63 = vmatprep.subr.mxu0 0.0
  %64 = vmatpush1.msra.mxu0 0.0
  %65 = vmatprep.subr.mxu0 0.0
  %66 = vmatpush1.msra.mxu0 0.0
  %67 = vmatprep.subr.mxu0 0.0
  %68 = vmatpush1.msra.mxu0 0.0
  %69 = vmatprep.subr.mxu0 0.0
  %70 = vmatpush1.msra.mxu0 0.0
  %71 = vmatprep.subr.mxu0 0.0
  %72 = vmatpush1.msra.mxu0 0.0
  %73 = vmatprep.subr.mxu0 0.0
  %74 = vmatpush1.msra.mxu0 0.0
  %75 = vmatprep.subr.mxu0 0.0
  %76 = vmatpush1.msra.mxu0 0.0
  %77 = vmatprep.subr.mxu0 0.0
  %78 = vmatpush1.msra.mxu0 0.0
  %79 = vmatprep.subr.mxu0 0.0
  %80 = vmatpush1.msra.mxu0 0.0
  %81 = vmatprep.subr.mxu0 0.0
  %82 = vmatpush1.msra.mxu0 0.0
  %83 = vmatprep.subr.mxu0 0.0
  %84 = vmatpush1.msra.mxu0 0.0
  %85 = vmatprep.subr.mxu0 0.0
  %86 = vmatpush1.msra.mxu0 0.0
  %87 = vmatprep.subr.mxu0 0.0
  %88 = vmatpush1.msra.mxu0 0.0
  %89 = vmatprep.subr.mxu0 0.0
  %90 = vmatpush1.msra.mxu0 0.0
  %91 = vmatprep.subr.mxu0 0.0
  %92 = vmatpush1.msra.mxu0 0.0
  %93 = vmatprep.subr.mxu0 0.0
  %94 = vmatpush1.msra.mxu0 0.0
  %95 = vmatprep.subr.mxu0 0.0
  %96 = vmatpush1.msra.mxu0 0.0
  %97 = vmatprep.subr.mxu0 0.0
  %98 = vmatpush1.msra.mxu0 0.0
  %99 = vmatprep.subr.mxu0 0.0
  %100 = vmatpush1.msra.mxu0 0.0
  %101 = vmatprep.subr.mxu0 0.0
  %102 = vmatpush1.msra.mxu0 0.0
  %103 = vmatprep.subr.mxu0 0.0
  %104 = vmatpush1.msra.mxu0 0.0
  %105 = vmatprep.mubr.f32.mxu0 0.0
  %106 = vmatmul.mubr.f32.gmra.mrb[0].mxu0 %v26
  %v107 = vpop.f32.mrb[0].mxu0
  %v108 = vadd.f32 0.0, %v107
  %v109 = vpop.f32.mrb[0].mxu0
  %110 = vmatprep.mubr.f32.mxu0 0.0
  %111 = vmatmul.mubr.f32.gmra.mrb[0].mxu0 %v29
  %v112 = vpop.f32.mrb[0].mxu0
  %v113 = vadd.f32 0.0, %v112
  %v114 = vpop.f32.mrb[0].mxu0
  %115 = vmatprep.mubr.f32.mxu0 0.0
  %116 = vmatmul.mubr.f32.gmra.mrb[0].mxu0 %v32
  %v117 = vpop.f32.mrb[0].mxu0
  %v118 = vadd.f32 0.0, %v117
  %v119 = vpop.f32.mrb[0].mxu0
  %120 = vmatprep.mubr.f32.mxu0 0.0
  %121 = vmatmul.mubr.f32.gmra.mrb[0].mxu0 %v35
  %v122 = vpop.f32.mrb[0].mxu0
  %v123 = vadd.f32 0.0, %v122
  %v124 = vpop.f32.mrb[0].mxu0
  %125 = vdwg.mxu0
  %v126 = vmin.f32 %v108, %v113
  %v127 = vmin.f32 %v118, %v123
  %v128 = vmin.f32 %v126, %v127
  %v129 = vrot.slane %v128, 4
  %v130 = vmin.f32 %v128, %v129
  %v131 = vrot.slane %v130, 2
  %v132 = vmin.f32 %v130, %v131
  %v133 = vrot.slane %v132, 1
  %v134 = vmin.f32 %v132, %v133
  %v135 = vlaneseq
  %v136 = vshrl.u32 %v135, 7
  %v137 = vadd.s32 %v136, 8
  %v138 = vadd.s32 %v136, 16
  %v139 = vadd.s32 %v136, 24
  %s140 = smul.u32 0, 32
  %v141 = vstv %s140
  %v142 = vadd.s32 %v136, %v141
  %v143 = vadd.s32 %v137, %v141
  %v144 = vadd.s32 %v138, %v141
  %v145 = vadd.s32 %v139, %v141
  %vm146 = vcmp.le.f32.partialorder %v108, %v134
  %vm147 = vcmp.le.f32.partialorder %v113, %v134
  %vm148 = vcmp.le.f32.partialorder %v118, %v134
  %vm149 = vcmp.le.f32.partialorder %v123, %v134
  %v150 = vsel %vm146, %v142, 2147483647
  %v151 = vsel %vm147, %v143, 2147483647
  %v152 = vsel %vm148, %v144, 2147483647
  %v153 = vsel %vm149, %v145, 2147483647
  %vm154 = vcmp.lt.s32.totalorder %v150, %v151
  %v155 = vsel %vm154, %v150, %v151
  %vm156 = vcmp.lt.s32.totalorder %v152, %v153
  %v157 = vsel %vm156, %v152, %v153
  %vm158 = vcmp.lt.s32.totalorder %v155, %v157
  %v159 = vsel %vm158, %v155, %v157
  %v160 = vrot.slane %v159, 4
  %vm161 = vcmp.lt.s32.totalorder %v159, %v160
  %v162 = vsel %vm161, %v159, %v160
  %v163 = vrot.slane %v162, 2
  %vm164 = vcmp.lt.s32.totalorder %v162, %v163
  %v165 = vsel %vm164, %v162, %v163
  %v166 = vrot.slane %v165, 1
  %vm167 = vcmp.lt.s32.totalorder %v165, %v166
  %v168 = vsel %vm167, %v165, %v166
  %v169 = vld [vmem:[#allocation2] sm:$0x1]
  %vm170 = vcmp.lt.f32.partialorder %v134, %v169
  %v171 = vld [vmem:[#allocation3] sm:$0x1]
  %v172 = vsel %vm170, %v168, %v171
  %173 = vst [vmem:[#allocation3] sm:$0x1] %v172
  %v174 = vld [vmem:[#allocation2] sm:$0x1]
  %v175 = vsel %vm170, %v134, %v174
  %176 = vst [vmem:[#allocation2] sm:$0x1] %v175
  // Predicated region
  $region14: #{_lambda_.1} parent=0 // pred_check
    %p177 = pneg %p11
  $region15: #{_lambda_.1} parent=0 // pred_check_branch
    %179 = sbr.rel (%p177) target = $region17
  $region16: #{_lambda_.1} parent=0 // pred_region
    %v180 = vld [vmem:[#allocation3] sm:$0x1]
    %181 = vst [vmem:[%s2] sm:$0x1] %v180
  $region17: #{_lambda_.1} parent=0 // pred_fallthru
    _
  // Predicated region
  $region18: #{_lambda_.1} parent=0 // pred_check
    _
  $region19: #{_lambda_.1} parent=0 // pred_check_branch
    %183 = sbr.rel (0) target = $region21
  $region20: #{_lambda_.1} parent=0 // pred_region
    _
  $region21: #{_lambda_.1} parent=0 // pred_fallthru
    _
  // Predicated region
  $region22: #{_lambda_.1} parent=0 // pred_check
    _
  $region23: #{_lambda_.1} parent=0 // pred_check_branch
    %185 = sbr.rel (0) target = $region25
  $region24: #{_lambda_.1} parent=0 // pred_region
    _
  $region25: #{_lambda_.1} parent=0 // pred_fallthru
    _

</llo_original>
